<compile_context>
chip_gen: v7x
topology: tpu7x:2x2x1
jax: 0.10.0
libtpu: 0.0.40
codegen_flags: <defaults>
</compile_context>

<pallas_src>
import functools
import math

import numpy as np
import jax
import jax.numpy as jnp
from jax import lax
from jax.experimental import pallas as pl
from jax.experimental.pallas import tpu as pltpu


def _round_up(x, m):
    return ((x + m - 1) // m) * m


def _bilinear_attn_kernel(*refs, lk_valid, mxu_dtype, has_mask):
    if has_mask:
        q_ref, k_ref, v_ref, m_ref, w_ref, out_ref, attn_ref = refs
    else:
        q_ref, k_ref, v_ref, w_ref, out_ref, attn_ref = refs
        m_ref = None

    q = q_ref[...]            # (TB, Lq_p, Hq_p)  already in mxu_dtype
    k = k_ref[...]            # (TB, Lk_p, Hk_p)
    v = v_ref[...]            # (TB, Lk_p, Hv_p)
    w = w_ref[...]            # (Hq_p, Hk_p)

    # qw = query @ W : contract the query-hidden axis directly (no
    # flatten/reshape copies), f32 accumulation on the MXU.
    qw = lax.dot_general(q, w,
                         dimension_numbers=(((2,), (0,)), ((), ())),
                         preferred_element_type=jnp.float32)      # (TB,Lq_p,Hk_p)

    # score = (q @ W) @ key^T, batched, contracting the shared hidden axis
    # (no explicit key transpose / XLU copy).
    score = lax.dot_general(qw.astype(mxu_dtype), k,
                            dimension_numbers=(((2,), (2,)), ((0,), (0,))),
                            preferred_element_type=jnp.float32)   # (TB,Lq_p,Lk_p)

    if has_mask:
        # PyTorch: score.masked_fill(~mask, -10000)
        score = jnp.where(m_ref[...] > 0, score, -10000.0)

    # Zero-padded key positions (Lk padded to a multiple of 128 for lane-dense
    # stores) must get ~0 softmax weight.
    if score.shape[-1] != lk_valid:
        col = lax.broadcasted_iota(jnp.int32, score.shape, dimension=2)
        score = jnp.where(col < lk_valid, score, -1e30)

    # Numerically-stable softmax over the key axis (f32).  Exact normalization
    # so the *returned* weights sum to 1 (HBM-bound kernel -> the EUP approx
    # reciprocal micro-opt is not worth the correctness caveat).
    m_max = jnp.max(score, axis=-1, keepdims=True)
    e = jnp.exp(score - m_max)
    weight = e / jnp.sum(e, axis=-1, keepdims=True)

    # context = weight @ value, batched MXU matmul, f32 accumulation.
    ctx = lax.dot_general(weight.astype(mxu_dtype), v,
                          dimension_numbers=(((2,), (1,)), ((0,), (0,))),
                          preferred_element_type=jnp.float32)     # (TB,Lq_p,Hv_p)

    out_ref[...] = ctx.astype(out_ref.dtype)
    attn_ref[...] = weight.astype(attn_ref.dtype)


def bilinear_attention(query, key, value, weights, mask=None, *,
                       mxu_dtype=jnp.bfloat16, out_dtype=None,
                       attn_dtype=jnp.float32):
    B, Lq, Hq = query.shape
    _, Lk, Hk = key.shape
    _, _, Hv = value.shape
    assert weights.shape == (Hq, Hk)
    assert key.shape[0] == B and value.shape[0] == B and value.shape[1] == Lk
    out_dtype = query.dtype if out_dtype is None else out_dtype
    has_mask = mask is not None

    # ---- lane/sublane padding (lane-dense stores + 128-aligned MXU dims) ----
    Lq_p = _round_up(Lq, 8)
    Lk_p = _round_up(Lk, 128)
    Hq_p = _round_up(Hq, 128)
    Hk_p = _round_up(Hk, 128)
    Hv_p = _round_up(Hv, 128)

    def pad3(x, d1, d2):
        return jnp.pad(x, ((0, 0), (0, d1 - x.shape[1]), (0, d2 - x.shape[2])))

    # Pad + cast in one fused XLA pass; on the fast path this halves the HBM
    # bytes the kernel reads for q/k/v/W.
    q_p = pad3(query, Lq_p, Hq_p).astype(mxu_dtype)
    k_p = pad3(key, Lk_p, Hk_p).astype(mxu_dtype)
    v_p = pad3(value, Lk_p, Hv_p).astype(mxu_dtype)
    w_p = jnp.pad(weights, ((0, Hq_p - Hq), (0, Hk_p - Hk))).astype(mxu_dtype)
    if has_mask:
        m_p = pad3(mask.astype(jnp.float32), Lq_p, Lk_p)   # padded -> masked

    # ---- generation-aware VMEM budget & TB (batch tile) selection ----------
    try:
        vmem_cap = int(pltpu.get_tpu_info().vmem_capacity_bytes)
    except Exception:
        vmem_cap = 64 << 20          # conservative fallback (v7x-sized)
    budget = int(vmem_cap * 0.60)    # double-buffered tiles + temporaries
    vmem_limit = int(vmem_cap * 0.78)  # ~50 MiB on v7x, ~100 MiB on v5e/v6e

    itm = jnp.dtype(mxu_dtype).itemsize
    ob = jnp.dtype(out_dtype).itemsize
    ab = jnp.dtype(attn_dtype).itemsize
    # Double-buffered I/O tiles per batch element.
    per_io = ((Lq_p * Hq_p + Lk_p * Hk_p + Lk_p * Hv_p) * itm
              + Lq_p * Hv_p * ob + Lq_p * Lk_p * ab)
    if has_mask:
        per_io += Lq_p * Lk_p * 4
    w_tile = Hq_p * Hk_p * itm
    # Compute temporaries per batch element: f32 qw/score/e/weight/ctx plus
    # the mxu_dtype cast copies of qw and weight.
    per_tmp = (4 * (Lq_p * Hk_p + 3 * Lq_p * Lk_p + Lq_p * Hv_p)
               + itm * (Lq_p * Hk_p + Lq_p * Lk_p))

    def fits(tb):
        return 2 * tb * per_io + 2 * w_tile + tb * per_tmp <= budget

    divisors = [d for d in range(1, B + 1) if B % d == 0]
    # Keep >= 2 grid steps (pipelining + v7x megacore); B == 1 is the only
    # unavoidable single-step case.
    cands = [d for d in divisors if fits(d) and (B // d >= 2 or B == 1)]
    if not cands:
        cands = [1]
    even = [d for d in cands if (B // d) % 2 == 0]   # prefer 2-TC-shardable
    TB = max(even) if even else max(cands)

    # ---- pallas_call ---------------------------------------------------------
    in_specs = [
        pl.BlockSpec((TB, Lq_p, Hq_p), lambda b: (b, 0, 0)),
        pl.BlockSpec((TB, Lk_p, Hk_p), lambda b: (b, 0, 0)),
        pl.BlockSpec((TB, Lk_p, Hv_p), lambda b: (b, 0, 0)),
    ]
    args = [q_p, k_p, v_p]
    if has_mask:
        in_specs.append(pl.BlockSpec((TB, Lq_p, Lk_p), lambda b: (b, 0, 0)))
        args.append(m_p)
    in_specs.append(pl.BlockSpec((Hq_p, Hk_p), lambda b: (0, 0)))
    args.append(w_p)

    kernel = functools.partial(_bilinear_attn_kernel,
                               lk_valid=Lk, mxu_dtype=mxu_dtype,
                               has_mask=has_mask)

    out_p, attn_p = pl.pallas_call(
        kernel,
        out_shape=(
            jax.ShapeDtypeStruct((B, Lq_p, Hv_p), out_dtype),
            jax.ShapeDtypeStruct((B, Lq_p, Lk_p), attn_dtype),
        ),
        grid_spec=pltpu.PrefetchScalarGridSpec(
            num_scalar_prefetch=0,
            grid=(B // TB,),
            in_specs=in_specs,
            out_specs=[
                pl.BlockSpec((TB, Lq_p, Hv_p), lambda b: (b, 0, 0)),
                pl.BlockSpec((TB, Lq_p, Lk_p), lambda b: (b, 0, 0)),
            ],
        ),
        compiler_params=pltpu.CompilerParams(
            dimension_semantics=("parallel",),
            vmem_limit_bytes=vmem_limit),
    )(*args)

    # Slice the lane padding back off.
    return out_p[:, :Lq, :Hv], attn_p[:, :Lq, :Lk]


def bilinear_attention_ref(query, key, value, weights, mask=None):
    # Pure-JAX reference matching the PyTorch semantics exactly.
    qw = jnp.einsum("bqh,hk->bqk", query, weights)
    score = jnp.einsum("bqk,blk->bql", qw, key)
    if mask is not None:
        score = jnp.where(mask, score, -10000.0)
    weight = jax.nn.softmax(score, axis=-1)
    out = jnp.einsum("bql,blv->bqv", weight, value)
    return out, weight


if __name__ == "__main__":
    B, Lq, Lk = 2, 8, 8
    Hq = Hk = Hv = 32

    key0 = jax.random.PRNGKey(0)
    k_q, k_k, k_v, k_w, k_m = jax.random.split(key0, 5)

    query = jax.random.normal(k_q, (B, Lq, Hq), dtype=jnp.float32)
    key_t = jax.random.normal(k_k, (B, Lk, Hk), dtype=jnp.float32)
    value = jax.random.normal(k_v, (B, Lk, Hv), dtype=jnp.float32)

    # xavier_uniform_ for a (query_size, key_size) parameter
    bound = math.sqrt(6.0 / (Hq + Hk))
    weights = jax.random.uniform(
        k_w, (Hq, Hk), dtype=jnp.float32, minval=-bound, maxval=bound)

    # ---- precise path (f32 MXU) : tight tolerance, no mask -----------------
    out_ref, attn_ref = bilinear_attention_ref(query, key_t, value, weights)
    out, attn = bilinear_attention(query, key_t, value, weights,
                                   mxu_dtype=jnp.float32)
    out = jax.block_until_ready(out)
    attn = jax.block_until_ready(attn)
    np.testing.assert_allclose(np.asarray(out), np.asarray(out_ref),
                               rtol=1e-5, atol=1e-5)
    np.testing.assert_allclose(np.asarray(attn), np.asarray(attn_ref),
                               rtol=1e-5, atol=1e-5)

    # ---- precise path with an attention mask --------------------------------
    mask = jax.random.bernoulli(k_m, 0.7, (B, Lq, Lk))
    out_rm, attn_rm = bilinear_attention_ref(query, key_t, value, weights, mask)
    out_m, attn_m = bilinear_attention(query, key_t, value, weights, mask,
                                       mxu_dtype=jnp.float32)
    out_m = jax.block_until_ready(out_m)
    attn_m = jax.block_until_ready(attn_m)
    np.testing.assert_allclose(np.asarray(out_m), np.asarray(out_rm),
                               rtol=1e-5, atol=1e-5)
    np.testing.assert_allclose(np.asarray(attn_m), np.asarray(attn_rm),
                               rtol=1e-5, atol=1e-5)

    # ---- fast path (default bf16 MXU I/O, f32 softmax/accumulation) --------
    out_f, attn_f = bilinear_attention(query, key_t, value, weights)
    out_f = jax.block_until_ready(out_f)
    attn_f = jax.block_until_ready(attn_f)
    np.testing.assert_allclose(np.asarray(out_f), np.asarray(out_ref),
                               rtol=5e-2, atol=5e-2)
    np.testing.assert_allclose(np.asarray(attn_f), np.asarray(attn_ref),
                               rtol=5e-2, atol=5e-2)

    print("KERNEL_OK")
</pallas_src>

<mosaic_0001>
module attributes {stable_mosaic.version = 11 : i64} {
  func.func @_bilinear_attn_kernel(%arg0: i32, %arg1: memref<1x8x128xf32, #tpu.memory_space<vmem>>, %arg2: memref<1x128x128xf32, #tpu.memory_space<vmem>>, %arg3: memref<1x128x128xf32, #tpu.memory_space<vmem>>, %arg4: memref<128x128xf32, #tpu.memory_space<vmem>>, %arg5: memref<1x8x128xf32, #tpu.memory_space<vmem>>, %arg6: memref<1x8x128xf32, #tpu.memory_space<vmem>>) attributes {dimension_semantics = [#tpu.dimension_semantics<parallel>], iteration_bounds = array<i64: 2>, scalar_prefetch = 0 : i64, scratch_operands = 0 : i64, tpu.core_type = #tpu.core_type<tc>, window_params = [{transform_indices = @transform_0, window_bounds = array<i64: 1, 8, 128>}, {transform_indices = @transform_1, window_bounds = array<i64: 1, 128, 128>}, {transform_indices = @transform_2, window_bounds = array<i64: 1, 128, 128>}, {pipeline_mode = #tpu.pipeline_mode<synchronous>, transform_indices = @transform_3, window_bounds = array<i64: 128, 128>}, {transform_indices = @transform_4, window_bounds = array<i64: 1, 8, 128>}, {transform_indices = @transform_5, window_bounds = array<i64: 1, 8, 128>}]} {
    %c0 = arith.constant 0 : index
    %c0_0 = arith.constant 0 : index
    %c0_1 = arith.constant 0 : index
    %0 = vector.load %arg1[%c0, %c0_0, %c0_1] : memref<1x8x128xf32, #tpu.memory_space<vmem>>, vector<1x8x128xf32>
    %c0_2 = arith.constant 0 : index
    %c0_3 = arith.constant 0 : index
    %c0_4 = arith.constant 0 : index
    %1 = vector.load %arg2[%c0_2, %c0_3, %c0_4] : memref<1x128x128xf32, #tpu.memory_space<vmem>>, vector<1x128x128xf32>
    %c0_5 = arith.constant 0 : index
    %c0_6 = arith.constant 0 : index
    %c0_7 = arith.constant 0 : index
    %2 = vector.load %arg3[%c0_5, %c0_6, %c0_7] : memref<1x128x128xf32, #tpu.memory_space<vmem>>, vector<1x128x128xf32>
    %c0_8 = arith.constant 0 : index
    %c0_9 = arith.constant 0 : index
    %3 = vector.load %arg4[%c0_8, %c0_9] : memref<128x128xf32, #tpu.memory_space<vmem>>, vector<128x128xf32>
    %cst = arith.constant dense<0.000000e+00> : vector<1x8x128xf32>
    %4 = tpu.matmul %0, %3, %cst {dimension_numbers = #tpu.dot_dimension_numbers<[2], [0], [0, 1], [1], [0, 0, 0, 1, 1, 1], [], []>} : vector<1x8x128xf32>, vector<128x128xf32>, vector<1x8x128xf32> -> vector<1x8x128xf32>
    %cst_10 = arith.constant dense<0.000000e+00> : vector<1x8x128xf32>
    %5 = tpu.matmul %4, %1, %cst_10 {dimension_numbers = #tpu.dot_dimension_numbers<[2], [2], [1], [1], [0, 0, 0, 1, 1, 1], [0], [0]>} : vector<1x8x128xf32>, vector<1x128x128xf32>, vector<1x8x128xf32> -> vector<1x8x128xf32>
    %6 = tpu.iota {dimensions = array<i32: 2>} : vector<1x8x128xi32>
    %c8_i32 = arith.constant 8 : i32
    %7 = vector.broadcast %c8_i32 : i32 to vector<1x8x128xi32>
    %8 = arith.cmpi slt, %6, %7 : vector<1x8x128xi32>
    %cst_11 = arith.constant -1.000000e+30 : f32
    %9 = vector.broadcast %cst_11 : f32 to vector<1x8x128xf32>
    %10 = arith.select %8, %5, %9 : vector<1x8x128xi1>, vector<1x8x128xf32>
    %cst_12 = arith.constant dense<0xFF800000> : vector<1x8xf32>
    %11 = vector.multi_reduction <maximumf>, %10, %cst_12 [2] : vector<1x8x128xf32> to vector<1x8xf32>
    %12 = vector.shape_cast %11 : vector<1x8xf32> to vector<1x8x1xf32>
    %13 = vector.broadcast %12 : vector<1x8x1xf32> to vector<1x8x128xf32>
    %14 = arith.subf %10, %13 : vector<1x8x128xf32>
    %15 = math.exp %14 : vector<1x8x128xf32>
    %cst_13 = arith.constant dense<0.000000e+00> : vector<1x8xf32>
    %16 = vector.multi_reduction <add>, %15, %cst_13 [2] : vector<1x8x128xf32> to vector<1x8xf32>
    %17 = vector.shape_cast %16 : vector<1x8xf32> to vector<1x8x1xf32>
    %18 = vector.broadcast %17 : vector<1x8x1xf32> to vector<1x8x128xf32>
    %19 = arith.divf %15, %18 : vector<1x8x128xf32>
    %cst_14 = arith.constant dense<0.000000e+00> : vector<1x8x128xf32>
    %20 = tpu.matmul %19, %2, %cst_14 {dimension_numbers = #tpu.dot_dimension_numbers<[2], [1], [1], [2], [0, 0, 0, 1, 1, 2], [0], [0]>} : vector<1x8x128xf32>, vector<1x128x128xf32>, vector<1x8x128xf32> -> vector<1x8x128xf32>
    %c0_15 = arith.constant 0 : index
    %c0_16 = arith.constant 0 : index
    %c0_17 = arith.constant 0 : index
    %21 = vector.load %arg5[%c0_15, %c0_16, %c0_17] : memref<1x8x128xf32, #tpu.memory_space<vmem>>, vector<1x8x128xf32>
    tpu.vector_store %arg5[%c0_15, %c0_16, %c0_17], %20 {strides = array<i32>} : memref<1x8x128xf32, #tpu.memory_space<vmem>>, vector<1x8x128xf32>,
    %c0_18 = arith.constant 0 : index
    %c0_19 = arith.constant 0 : index
    %c0_20 = arith.constant 0 : index
    %22 = vector.load %arg6[%c0_18, %c0_19, %c0_20] : memref<1x8x128xf32, #tpu.memory_space<vmem>>, vector<1x8x128xf32>
    tpu.vector_store %arg6[%c0_18, %c0_19, %c0_20], %19 {strides = array<i32>} : memref<1x8x128xf32, #tpu.memory_space<vmem>>, vector<1x8x128xf32>,
    return
  }
  func.func @transform_0(%arg0: i32) -> (i32, i32, i32) {
    %c0_i32 = arith.constant 0 : i32
    %c0_i32_0 = arith.constant 0 : i32
    %c0_i32_1 = arith.constant 0 : i32
    return %arg0, %c0_i32, %c0_i32_0 : i32, i32, i32
  }
  func.func @transform_1(%arg0: i32) -> (i32, i32, i32) {
    %c0_i32 = arith.constant 0 : i32
    %c0_i32_0 = arith.constant 0 : i32
    %c0_i32_1 = arith.constant 0 : i32
    return %arg0, %c0_i32, %c0_i32_0 : i32, i32, i32
  }
  func.func @transform_2(%arg0: i32) -> (i32, i32, i32) {
    %c0_i32 = arith.constant 0 : i32
    %c0_i32_0 = arith.constant 0 : i32
    %c0_i32_1 = arith.constant 0 : i32
    return %arg0, %c0_i32, %c0_i32_0 : i32, i32, i32
  }
  func.func @transform_3(%arg0: i32) -> (i32, i32) {
    %c0_i32 = arith.constant 0 : i32
    %c0_i32_0 = arith.constant 0 : i32
    %c0_i32_1 = arith.constant 0 : i32
    return %c0_i32, %c0_i32_0 : i32, i32
  }
  func.func @transform_4(%arg0: i32) -> (i32, i32, i32) {
    %c0_i32 = arith.constant 0 : i32
    %c0_i32_0 = arith.constant 0 : i32
    %c0_i32_1 = arith.constant 0 : i32
    return %arg0, %c0_i32, %c0_i32_0 : i32, i32, i32
  }
  func.func @transform_5(%arg0: i32) -> (i32, i32, i32) {
    %c0_i32 = arith.constant 0 : i32
    %c0_i32_0 = arith.constant 0 : i32
    %c0_i32_1 = arith.constant 0 : i32
    return %arg0, %c0_i32, %c0_i32_0 : i32, i32, i32
  }
}

</mosaic_0001>

<llo_original>
// kernel: tpu_custom_call.1
$region0: #{tpu_custom_call.1}
  #allocation0 [shape = 'u32[]', space=smem, size = 0x4, offset = 0x4, fixed_abs, tag = 'smem constant byte address 0x4 - core index']
  #allocation1 [shape = 'u32[144,128]{1,0:T(1,128)}', space=vmem, size = 0x12000, scoped, tag = 'internal scratch']
  %s0 = inlined_call_operand.hbm [shape: f32[2,8,128], index: 0, kind: input, shape index: {}]
  %s1 = inlined_call_operand.hbm [shape: f32[2,128,128], index: 1, kind: input, shape index: {}]
  %s2 = inlined_call_operand.hbm [shape: f32[2,128,128], index: 2, kind: input, shape index: {}]
  %s3 = inlined_call_operand.hbm [shape: f32[128,128], index: 3, kind: input, shape index: {}]
  %s4 = inlined_call_operand.hbm [shape: f32[2,8,128], index: 4, kind: output, shape index: {0}]
  %s5 = inlined_call_operand.hbm [shape: f32[2,8,128], index: 5, kind: output, shape index: {1}]
  %6 = xla_tuple %s4, %s5
  %s7 = sld [smem:[#allocation0]]
  $region73: #{tpu_custom_call.1} parent=0
    _
  %s9 = ssub.s32 1, %s7
  %s10 = scalar_select 0, %s9, %s7
  $region1: #{tpu_custom_call.1} parent=0
    #allocation2 [shape = 'u8[8192]{0}', space=vmem, size = 0x2000, scoped, tag = 'input window, operand 0']
    #allocation3 [shape = 's32[2]{0}', space=sflag, size = 0x8, scoped, tag = 'scoped memory for tpu_custom_call.1']
    #allocation4 [shape = 's32[2]{0}', space=sflag, size = 0x8, scoped, tag = 'scoped memory for tpu_custom_call.1']
    #allocation5 [shape = 'u8[131072]{0}', space=vmem, size = 0x20000, scoped, tag = 'input window, operand 1']
    #allocation6 [shape = 's32[2]{0}', space=sflag, size = 0x8, scoped, tag = 'scoped memory for tpu_custom_call.1']
    #allocation7 [shape = 'u8[131072]{0}', space=vmem, size = 0x20000, scoped, tag = 'input window, operand 2']
    #allocation8 [shape = 'u8[65536]{0}', space=vmem, size = 0x10000, scoped, tag = 'input window, operand 3, single buffered']
    #allocation9 [shape = 's32[1]{0}', space=sflag, size = 0x4, scoped, tag = 'scoped memory for tpu_custom_call.1']
    #allocation10 [shape = 'u8[8192]{0}', space=vmem, size = 0x2000, scoped, tag = 'output window, operand 0']
    #allocation11 [shape = 'u8[8192]{0}', space=vmem, size = 0x2000, scoped, tag = 'output window, operand 1']
    #allocation12 [shape = 's32[2]{0}', space=sflag, size = 0x8, scoped, tag = 'scoped memory for tpu_custom_call.1']
    %11 = vsyncpa [#allocation3], 0
    %s12 = scalar_lea.sflag [#allocation3], 1
    %13 = vsyncpa %s12, 0
    %14 = vsyncpa [#allocation6], 0
    %s15 = scalar_lea.sflag [#allocation6], 1
    %16 = vsyncpa %s15, 0
    %17 = vsyncpa [#allocation9], 0
    %18 = vsyncpa [#allocation4], 0
    %s19 = scalar_lea.sflag [#allocation4], 1
    %20 = vsyncpa %s19, 0
    %21 = vsyncpa [#allocation12], 0
    %s22 = scalar_lea.sflag [#allocation12], 1
    %23 = vsyncpa %s22, 0
    loop: start=0, step=1, limit=4
    $region2: #{tpu_custom_call.1} parent=1 // loop_pre_header
      _
    $region3: #{tpu_custom_call.1} parent=1 // loop_header
      %s25 = sphi 0, %s29
      %p26 = scmp.ge.s32.totalorder %s25, 4
      %s35 = sphi 0, %s37
      %s38 = sphi 0, %s35
      %s39 = sphi 0, %s38
      %s55 = sphi 0, %s39
      %s61 = sphi 0, %s63
      %s64 = sphi 0, %s61
      %s65 = sphi 0, %s64
      %s81 = sphi 0, %s65
      %s87 = sphi 0, %s89
      %s90 = sphi 0, %s87
      %s91 = sphi 0, %s90
      %s107 = sphi 0, %s91
      %s111 = sphi 0, %s111
      %s113 = sphi 0, %s111
      %s114 = sphi 0, %s113
      %s128 = sphi 0, %s114
      %s134 = sphi 0, %s136
      %s137 = sphi 0, %s134
      %s138 = sphi 0, %s137
      %s154 = sphi 0, %s138
      %s160 = sphi 0, %s162
      %s163 = sphi 0, %s160
      %s164 = sphi 0, %s163
      %s180 = sphi 0, %s164
    $region4: #{tpu_custom_call.1} parent=1 // loop_header_branch
      %28 = sbr.rel (%p26) target = $region8
    $region5: #{tpu_custom_call.1} parent=1 // loop_body
      %s30 = ssub.s32 %s25, 1
      %s31 = ssub.s32 %s25, 2
      %s32 = sadd.s32 %s25, 1
      %s33 = ssub.s32 %s25, %s32
      %p34 = scmp.eq.s32.totalorder %s33, 0
      %s36 = sadd.s32 %s35, 1
      %s37 = scalar_select %p34, %s35, %s36
      %p40 = pneg %p34
      %p41 = scmp.eq.s32.totalorder %s25, 1
      %p42 = por %p40, %p41
      %p43 = scmp.ne.s32.totalorder %s35, %s38
      %p44 = scmp.eq.s32.totalorder %s25, 0
      %p45 = por %p43, %p44
      %p46 = scmp.ne.s32.totalorder %s35, %s38
      %p47 = scmp.eq.s32.totalorder %s30, 1
      %p48 = por %p46, %p47
      %p49 = scmp.ne.s32.totalorder %s38, %s39
      %p50 = scmp.eq.s32.totalorder %s30, 0
      %p51 = por %p49, %p50
      %p52 = scmp.ne.s32.totalorder %s38, %s39
      %p53 = scmp.eq.s32.totalorder %s31, 1
      %p54 = por %p52, %p53
      %p56 = scmp.ne.s32.totalorder %s39, %s55
      %p57 = scmp.eq.s32.totalorder %s31, 0
      %p58 = por %p56, %p57
      %s59 = ssub.s32 %s25, %s32
      %p60 = scmp.eq.s32.totalorder %s59, 0
      %s62 = sadd.s32 %s61, 1
      %s63 = scalar_select %p60, %s61, %s62
      %p66 = pneg %p60
      %p67 = scmp.eq.s32.totalorder %s25, 1
      %p68 = por %p66, %p67
      %p69 = scmp.ne.s32.totalorder %s61, %s64
      %p70 = scmp.eq.s32.totalorder %s25, 0
      %p71 = por %p69, %p70
      %p72 = scmp.ne.s32.totalorder %s61, %s64
      %p73 = scmp.eq.s32.totalorder %s30, 1
      %p74 = por %p72, %p73
      %p75 = scmp.ne.s32.totalorder %s64, %s65
      %p76 = scmp.eq.s32.totalorder %s30, 0
      %p77 = por %p75, %p76
      %p78 = scmp.ne.s32.totalorder %s64, %s65
      %p79 = scmp.eq.s32.totalorder %s31, 1
      %p80 = por %p78, %p79
      %p82 = scmp.ne.s32.totalorder %s65, %s81
      %p83 = scmp.eq.s32.totalorder %s31, 0
      %p84 = por %p82, %p83
      %s85 = ssub.s32 %s25, %s32
      %p86 = scmp.eq.s32.totalorder %s85, 0
      %s88 = sadd.s32 %s87, 1
      %s89 = scalar_select %p86, %s87, %s88
      %p92 = pneg %p86
      %p93 = scmp.eq.s32.totalorder %s25, 1
      %p94 = por %p92, %p93
      %p95 = scmp.ne.s32.totalorder %s87, %s90
      %p96 = scmp.eq.s32.totalorder %s25, 0
      %p97 = por %p95, %p96
      %p98 = scmp.ne.s32.totalorder %s87, %s90
      %p99 = scmp.eq.s32.totalorder %s30, 1
      %p100 = por %p98, %p99
      %p101 = scmp.ne.s32.totalorder %s90, %s91
      %p102 = scmp.eq.s32.totalorder %s30, 0
      %p103 = por %p101, %p102
      %p104 = scmp.ne.s32.totalorder %s90, %s91
      %p105 = scmp.eq.s32.totalorder %s31, 1
      %p106 = por %p104, %p105
      %p108 = scmp.ne.s32.totalorder %s91, %s107
      %p109 = scmp.eq.s32.totalorder %s31, 0
      %p110 = por %p108, %p109
      %s112 = sadd.s32 %s111, 1
      %p115 = scmp.eq.s32.totalorder %s25, 1
      %p116 = scmp.ne.s32.totalorder %s111, %s113
      %p117 = scmp.eq.s32.totalorder %s25, 0
      %p118 = por %p116, %p117
      %p119 = scmp.ne.s32.totalorder %s111, %s113
      %p120 = scmp.eq.s32.totalorder %s30, 1
      %p121 = por %p119, %p120
      %p122 = scmp.ne.s32.totalorder %s113, %s114
      %p123 = scmp.eq.s32.totalorder %s30, 0
      %p124 = por %p122, %p123
      %p125 = scmp.ne.s32.totalorder %s113, %s114
      %p126 = scmp.eq.s32.totalorder %s31, 1
      %p127 = por %p125, %p126
      %p129 = scmp.ne.s32.totalorder %s114, %s128
      %p130 = scmp.eq.s32.totalorder %s31, 0
      %p131 = por %p129, %p130
      %s132 = ssub.s32 %s25, %s32
      %p133 = scmp.eq.s32.totalorder %s132, 0
      %s135 = sadd.s32 %s134, 1
      %s136 = scalar_select %p133, %s134, %s135
      %p139 = pneg %p133
      %p140 = scmp.eq.s32.totalorder %s25, 1
      %p141 = por %p139, %p140
      %p142 = scmp.ne.s32.totalorder %s134, %s137
      %p143 = scmp.eq.s32.totalorder %s25, 0
      %p144 = por %p142, %p143
      %p145 = scmp.ne.s32.totalorder %s134, %s137
      %p146 = scmp.eq.s32.totalorder %s30, 1
      %p147 = por %p145, %p146
      %p148 = scmp.ne.s32.totalorder %s137, %s138
      %p149 = scmp.eq.s32.totalorder %s30, 0
      %p150 = por %p148, %p149
      %p151 = scmp.ne.s32.totalorder %s137, %s138
      %p152 = scmp.eq.s32.totalorder %s31, 1
      %p153 = por %p151, %p152
      %p155 = scmp.ne.s32.totalorder %s138, %s154
      %p156 = scmp.eq.s32.totalorder %s31, 0
      %p157 = por %p155, %p156
      %s158 = ssub.s32 %s25, %s32
      %p159 = scmp.eq.s32.totalorder %s158, 0
      %s161 = sadd.s32 %s160, 1
      %s162 = scalar_select %p159, %s160, %s161
      %p165 = pneg %p159
      %p166 = scmp.eq.s32.totalorder %s25, 1
      %p167 = por %p165, %p166
      %p168 = scmp.ne.s32.totalorder %s160, %s163
      %p169 = scmp.eq.s32.totalorder %s25, 0
      %p170 = por %p168, %p169
      %p171 = scmp.ne.s32.totalorder %s160, %s163
      %p172 = scmp.eq.s32.totalorder %s30, 1
      %p173 = por %p171, %p172
      %p174 = scmp.ne.s32.totalorder %s163, %s164
      %p175 = scmp.eq.s32.totalorder %s30, 0
      %p176 = por %p174, %p175
      %p177 = scmp.ne.s32.totalorder %s163, %s164
      %p178 = scmp.eq.s32.totalorder %s31, 1
      %p179 = por %p177, %p178
      %p181 = scmp.ne.s32.totalorder %s164, %s180
      %p182 = scmp.eq.s32.totalorder %s31, 0
      %p183 = por %p181, %p182
      %p184 = scmp.le.s32.totalorder 1, %s25
      %p185 = scmp.lt.s32.totalorder %s25, 3
      %p186 = pnand %p184, %p185
      %p187 = pneg %p186
      // Predicated region
      $region9: #{tpu_custom_call.1} parent=5 // pred_check
        _
      $region10: #{tpu_custom_call.1} parent=5 // pred_check_branch
        %189 = sbr.rel (%p186) target = $region12
      $region11: #{tpu_custom_call.1} parent=5 // pred_region
        %s190 = ssub.s32 %s25, 1
        // Predicated region
        $region13: #{tpu_custom_call.1} parent=11 // pred_check
          %p191 = pneg %p124
        $region14: #{tpu_custom_call.1} parent=11 // pred_check_branch
          %193 = sbr.rel (%p191) target = $region16
        $region15: #{tpu_custom_call.1} parent=11 // pred_region
          %s195 = ssub.s32 2048, 2048
          %196 = vsyncadd [#allocation9], %s195
          %s197 = sshll.u32 [#allocation8], 4
          %s198 = int_to_ptr.vmem [resolvable:$true] %s197
          %203 = dma.hbm_to_vmem [thread:$0]  %s3, 2048, %s198, [#allocation9], 128, 128, 8
        $region16: #{tpu_custom_call.1} parent=11 // pred_fallthru
          _
      $region12: #{tpu_custom_call.1} parent=5 // pred_fallthru
        _
      %p204 = scmp.lt.s32.totalorder %s25, 2
      // Predicated region
      $region17: #{tpu_custom_call.1} parent=5 // pred_check
        %p205 = pneg %p204
      $region18: #{tpu_custom_call.1} parent=5 // pred_check_branch
        %207 = sbr.rel (%p205) target = $region20
      $region19: #{tpu_custom_call.1} parent=5 // pred_region
        // Predicated region
        $region21: #{tpu_custom_call.1} parent=19 // pred_check
          %p208 = pneg %p45
        $region22: #{tpu_custom_call.1} parent=19 // pred_check_branch
          %210 = sbr.rel (%p208) target = $region24
        $region23: #{tpu_custom_call.1} parent=19 // pred_region
          %s211 = sand.u32 %s35, 1
          %s212 = scalar_lea.sflag [#allocation3], %s211
          %s213 = sand.u32 %s35, 1
          %s214 = smul.addr %s213, 8
          %s215 = scalar_lea.vmem [#allocation2], %s214
          %s217 = ssub.s32 128, 128
          %218 = vsyncadd %s212, %s217
          %s219 = smul.addr %s25, 128
          %s220 = scalar_lea.hbm %s0, %s219
          %s222 = sshll.u32 %s215, 4
          %s223 = int_to_ptr.vmem [resolvable:$true] %s222
          %225 = dma.hbm_to_vmem [thread:$0]  %s220, 128, %s223, %s212
        $region24: #{tpu_custom_call.1} parent=19 // pred_fallthru
          _
        // Predicated region
        $region25: #{tpu_custom_call.1} parent=19 // pred_check
          %p226 = pneg %p71
        $region26: #{tpu_custom_call.1} parent=19 // pred_check_branch
          %228 = sbr.rel (%p226) target = $region28
        $region27: #{tpu_custom_call.1} parent=19 // pred_region
          %s229 = sand.u32 %s25, 1
          %s230 = scalar_lea.sflag [#allocation6], %s229
          %s231 = sand.u32 %s61, 1
          %s232 = smul.addr %s231, 128
          %s233 = scalar_lea.vmem [#allocation5], %s232
          %s235 = ssub.s32 2048, 2048
          %236 = vsyncadd %s230, %s235
          %s237 = smul.addr %s25, 16
          %s238 = smul.addr %s237, 128
          %s239 = scalar_lea.hbm %s1, %s238
          %s240 = sshll.u32 %s233, 4
          %s241 = int_to_ptr.vmem [resolvable:$true] %s240
          %246 = dma.hbm_to_vmem [thread:$0]  %s239, 2048, %s241, %s230, 128, 128, 8
        $region28: #{tpu_custom_call.1} parent=19 // pred_fallthru
          _
        // Predicated region
        $region29: #{tpu_custom_call.1} parent=19 // pred_check
          %p247 = pneg %p97
        $region30: #{tpu_custom_call.1} parent=19 // pred_check_branch
          %249 = sbr.rel (%p247) target = $region32
        $region31: #{tpu_custom_call.1} parent=19 // pred_region
          %s250 = sand.u32 %s25, 1
          %s251 = scalar_lea.sflag [#allocation6], %s250
          %s252 = sand.u32 %s87, 1
          %s253 = smul.addr %s252, 128
          %s254 = scalar_lea.vmem [#allocation7], %s253
          %s256 = ssub.s32 2048, 2048
          %257 = vsyncadd %s251, %s256
          %s258 = smul.addr %s25, 16
          %s259 = smul.addr %s258, 128
          %s260 = scalar_lea.hbm %s2, %s259
          %s261 = sshll.u32 %s254, 4
          %s262 = int_to_ptr.vmem [resolvable:$true] %s261
          %267 = dma.hbm_to_vmem [thread:$0]  %s260, 2048, %s262, %s251, 128, 128, 8
        $region32: #{tpu_custom_call.1} parent=19 // pred_fallthru
          _
      $region20: #{tpu_custom_call.1} parent=5 // pred_fallthru
        _
      %p268 = scmp.le.s32.totalorder 1, %s25
      %p269 = scmp.lt.s32.totalorder %s25, 3
      %p270 = pnand %p268, %p269
      %p271 = pneg %p270
      // Predicated region
      $region33: #{tpu_custom_call.1} parent=5 // pred_check
        _
      $region34: #{tpu_custom_call.1} parent=5 // pred_check_branch
        %273 = sbr.rel (%p270) target = $region36
      $region35: #{tpu_custom_call.1} parent=5 // pred_region
        %s274 = ssub.s32 %s25, 1
        %s275 = sand.u32 %s38, 1
        %s276 = scalar_lea.sflag [#allocation3], %s275
        %s277 = sand.u32 %s38, 1
        %s278 = smul.addr %s277, 8
        %s279 = scalar_lea.vmem [#allocation2], %s278
        // Predicated region
        $region37: #{tpu_custom_call.1} parent=35 // pred_check
          %p280 = pneg %p51
        $region38: #{tpu_custom_call.1} parent=35 // pred_check_branch
          %282 = sbr.rel (%p280) target = $region40
        $region39: #{tpu_custom_call.1} parent=35 // pred_region
          %283 = dma.done %s276, 128
        $region40: #{tpu_custom_call.1} parent=35 // pred_fallthru
          _
        %s284 = sand.u32 %s30, 1
        %s285 = scalar_lea.sflag [#allocation6], %s284
        %s286 = sand.u32 %s64, 1
        %s287 = smul.addr %s286, 128
        %s288 = scalar_lea.vmem [#allocation5], %s287
        // Predicated region
        $region41: #{tpu_custom_call.1} parent=35 // pred_check
          %p289 = pneg %p77
        $region42: #{tpu_custom_call.1} parent=35 // pred_check_branch
          %291 = sbr.rel (%p289) target = $region44
        $region43: #{tpu_custom_call.1} parent=35 // pred_region
          %292 = dma.done %s285, 2048
        $region44: #{tpu_custom_call.1} parent=35 // pred_fallthru
          _
        %s293 = sand.u32 %s30, 1
        %s294 = scalar_lea.sflag [#allocation6], %s293
        %s295 = sand.u32 %s90, 1
        %s296 = smul.addr %s295, 128
        %s297 = scalar_lea.vmem [#allocation7], %s296
        // Predicated region
        $region45: #{tpu_custom_call.1} parent=35 // pred_check
          %p298 = pneg %p103
        $region46: #{tpu_custom_call.1} parent=35 // pred_check_branch
          %300 = sbr.rel (%p298) target = $region48
        $region47: #{tpu_custom_call.1} parent=35 // pred_region
          %301 = dma.done %s294, 2048
        $region48: #{tpu_custom_call.1} parent=35 // pred_fallthru
          _
        // Predicated region
        $region49: #{tpu_custom_call.1} parent=35 // pred_check
          %p302 = pneg %p124
        $region50: #{tpu_custom_call.1} parent=35 // pred_check_branch
          %304 = sbr.rel (%p302) target = $region52
        $region51: #{tpu_custom_call.1} parent=35 // pred_region
          %305 = dma.done [#allocation9], 2048
        $region52: #{tpu_custom_call.1} parent=35 // pred_fallthru
          _
        %s306 = sand.u32 %s38, 1
        %s307 = scalar_lea.sflag [#allocation3], %s306
        %s308 = sand.u32 %s38, 1
        %s309 = smul.addr %s308, 8
        %s310 = scalar_lea.vmem [#allocation2], %s309
        %p311 = pneg %p51
        %p312 = pneg %p48
        %s313 = sand.u32 %s30, 1
        %s314 = scalar_lea.sflag [#allocation6], %s313
        %s315 = sand.u32 %s64, 1
        %s316 = smul.addr %s315, 128
        %s317 = scalar_lea.vmem [#allocation5], %s316
        %p318 = pneg %p77
        %p319 = pneg %p74
        %s320 = sand.u32 %s30, 1
        %s321 = scalar_lea.sflag [#allocation6], %s320
        %s322 = sand.u32 %s90, 1
        %s323 = smul.addr %s322, 128
        %s324 = scalar_lea.vmem [#allocation7], %s323
        %p325 = pneg %p103
        %p326 = pneg %p100
        %p327 = pneg %p124
        %p328 = pneg %p121
        %p329 = pneg %p150
        %p330 = pneg %p147
        %s331 = sand.u32 %s137, 1
        %s332 = scalar_lea.sflag [#allocation4], %s331
        %s333 = sand.u32 %s137, 1
        %s334 = smul.addr %s333, 8
        %s335 = scalar_lea.vmem [#allocation10], %s334
        %p336 = pneg %p176
        %p337 = pneg %p173
        %s338 = sand.u32 %s163, 1
        %s339 = scalar_lea.sflag [#allocation12], %s338
        %s340 = sand.u32 %s163, 1
        %s341 = smul.addr %s340, 8
        %s342 = scalar_lea.vmem [#allocation11], %s341
        %v343 = vld [vmem:[%s279] sm:$0xff]
        %v344 = vld [vmem:[%s288] sm:$0xff]
        %v345 = vld [vmem:[%s288 + $0x8] sm:$0xff]
        %v346 = vld [vmem:[%s288 + $0x10] sm:$0xff]
        %v347 = vld [vmem:[%s288 + $0x18] sm:$0xff]
        %v348 = vld [vmem:[%s288 + $0x20] sm:$0xff]
        %v349 = vld [vmem:[%s288 + $0x28] sm:$0xff]
        %v350 = vld [vmem:[%s288 + $0x30] sm:$0xff]
        %v351 = vld [vmem:[%s288 + $0x38] sm:$0xff]
        %v352 = vld [vmem:[%s288 + $0x40] sm:$0xff]
        %v353 = vld [vmem:[%s288 + $0x48] sm:$0xff]
        %v354 = vld [vmem:[%s288 + $0x50] sm:$0xff]
        %v355 = vld [vmem:[%s288 + $0x58] sm:$0xff]
        %v356 = vld [vmem:[%s288 + $0x60] sm:$0xff]
        %v357 = vld [vmem:[%s288 + $0x68] sm:$0xff]
        %v358 = vld [vmem:[%s288 + $0x70] sm:$0xff]
        %v359 = vld [vmem:[%s288 + $0x78] sm:$0xff]
        %v360 = vld [vmem:[%s297] sm:$0xff]
        %v361 = vld [vmem:[%s297 + $0x8] sm:$0xff]
        %v362 = vld [vmem:[%s297 + $0x10] sm:$0xff]
        %v363 = vld [vmem:[%s297 + $0x18] sm:$0xff]
        %v364 = vld [vmem:[%s297 + $0x20] sm:$0xff]
        %v365 = vld [vmem:[%s297 + $0x28] sm:$0xff]
        %v366 = vld [vmem:[%s297 + $0x30] sm:$0xff]
        %v367 = vld [vmem:[%s297 + $0x38] sm:$0xff]
        %v368 = vld [vmem:[%s297 + $0x40] sm:$0xff]
        %v369 = vld [vmem:[%s297 + $0x48] sm:$0xff]
        %v370 = vld [vmem:[%s297 + $0x50] sm:$0xff]
        %v371 = vld [vmem:[%s297 + $0x58] sm:$0xff]
        %v372 = vld [vmem:[%s297 + $0x60] sm:$0xff]
        %v373 = vld [vmem:[%s297 + $0x68] sm:$0xff]
        %v374 = vld [vmem:[%s297 + $0x70] sm:$0xff]
        %v375 = vld [vmem:[%s297 + $0x78] sm:$0xff]
        %v376 = vld [vmem:[#allocation8] sm:$0xff]
        %v377 = vld [vmem:[#allocation8 + $0x8] sm:$0xff]
        %v378 = vld [vmem:[#allocation8 + $0x10] sm:$0xff]
        %v379 = vld [vmem:[#allocation8 + $0x18] sm:$0xff]
        %v380 = vld [vmem:[#allocation8 + $0x20] sm:$0xff]
        %v381 = vld [vmem:[#allocation8 + $0x28] sm:$0xff]
        %v382 = vld [vmem:[#allocation8 + $0x30] sm:$0xff]
        %v383 = vld [vmem:[#allocation8 + $0x38] sm:$0xff]
        %v384 = vld [vmem:[#allocation8 + $0x40] sm:$0xff]
        %v385 = vld [vmem:[#allocation8 + $0x48] sm:$0xff]
        %v386 = vld [vmem:[#allocation8 + $0x50] sm:$0xff]
        %v387 = vld [vmem:[#allocation8 + $0x58] sm:$0xff]
        %v388 = vld [vmem:[#allocation8 + $0x60] sm:$0xff]
        %v389 = vld [vmem:[#allocation8 + $0x68] sm:$0xff]
        %v390 = vld [vmem:[#allocation8 + $0x70] sm:$0xff]
        %v391 = vld [vmem:[#allocation8 + $0x78] sm:$0xff]
        %392 = vmatprep.subr.mxu0 0.0
        %393 = vmatpush1.msra.mxu0 %v376
        %394 = vmatprep.subr.mxu0 0.0
        %395 = vmatpush1.msra.mxu0 %v377
        %396 = vmatprep.subr.mxu0 0.0
        %397 = vmatpush1.msra.mxu0 %v378
        %398 = vmatprep.subr.mxu0 0.0
        %399 = vmatpush1.msra.mxu0 %v379
        %400 = vmatprep.subr.mxu0 0.0
        %401 = vmatpush1.msra.mxu0 %v380
        %402 = vmatprep.subr.mxu0 0.0
        %403 = vmatpush1.msra.mxu0 %v381
        %404 = vmatprep.subr.mxu0 0.0
        %405 = vmatpush1.msra.mxu0 %v382
        %406 = vmatprep.subr.mxu0 0.0
        %407 = vmatpush1.msra.mxu0 %v383
        %408 = vmatprep.subr.mxu0 0.0
        %409 = vmatpush1.msra.mxu0 %v384
        %410 = vmatprep.subr.mxu0 0.0
        %411 = vmatpush1.msra.mxu0 %v385
        %412 = vmatprep.subr.mxu0 0.0
        %413 = vmatpush1.msra.mxu0 %v386
        %414 = vmatprep.subr.mxu0 0.0
        %415 = vmatpush1.msra.mxu0 %v387
        %416 = vmatprep.subr.mxu0 0.0
        %417 = vmatpush1.msra.mxu0 %v388
        %418 = vmatprep.subr.mxu0 0.0
        %419 = vmatpush1.msra.mxu0 %v389
        %420 = vmatprep.subr.mxu0 0.0
        %421 = vmatpush1.msra.mxu0 %v390
        %422 = vmatprep.subr.mxu0 0.0
        %423 = vmatpush1.msra.mxu0 %v391
        %424 = vmatprep.subr.mxu0 0.0
        %425 = vmatpush1.msra.mxu0 0.0
        %426 = vmatprep.subr.mxu0 0.0
        %427 = vmatpush1.msra.mxu0 0.0
        %428 = vmatprep.subr.mxu0 0.0
        %429 = vmatpush1.msra.mxu0 0.0
        %430 = vmatprep.subr.mxu0 0.0
        %431 = vmatpush1.msra.mxu0 0.0
        %432 = vmatprep.subr.mxu0 0.0
        %433 = vmatpush1.msra.mxu0 0.0
        %434 = vmatprep.subr.mxu0 0.0
        %435 = vmatpush1.msra.mxu0 0.0
        %436 = vmatprep.subr.mxu0 0.0
        %437 = vmatpush1.msra.mxu0 0.0
        %438 = vmatprep.subr.mxu0 0.0
        %439 = vmatpush1.msra.mxu0 0.0
        %440 = vmatprep.subr.mxu0 0.0
        %441 = vmatpush1.msra.mxu0 0.0
        %442 = vmatprep.subr.mxu0 0.0
        %443 = vmatpush1.msra.mxu0 0.0
        %444 = vmatprep.subr.mxu0 0.0
        %445 = vmatpush1.msra.mxu0 0.0
        %446 = vmatprep.subr.mxu0 0.0
        %447 = vmatpush1.msra.mxu0 0.0
        %448 = vmatprep.subr.mxu0 0.0
        %449 = vmatpush1.msra.mxu0 0.0
        %450 = vmatprep.subr.mxu0 0.0
        %451 = vmatpush1.msra.mxu0 0.0
        %452 = vmatprep.subr.mxu0 0.0
        %453 = vmatpush1.msra.mxu0 0.0
        %454 = vmatprep.subr.mxu0 0.0
        %455 = vmatpush1.msra.mxu0 0.0
        %456 = vmatprep.mubr.f32.mxu0 0.0
        %457 = vmatmul.mubr.f32.gmra.mrb[0].mxu0 %v343
        %v458 = vpop.f32.mrb[0].mxu0
        %v459 = vadd.f32 0.0, %v458
        %v460 = vpop.f32.mrb[0].mxu0
        %461 = vdwg.mxu0
        %462 = vmatprep.subr.mxu0 0.0
        %463 = vmatpush1.xpose.msra.mxu0 %v344
        %464 = vmatprep.subr.mxu0 0.0
        %465 = vmatpush1.xpose.msra.mxu0 %v345
        %466 = vmatprep.subr.mxu0 0.0
        %467 = vmatpush1.xpose.msra.mxu0 %v346
        %468 = vmatprep.subr.mxu0 0.0
        %469 = vmatpush1.xpose.msra.mxu0 %v347
        %470 = vmatprep.subr.mxu0 0.0
        %471 = vmatpush1.xpose.msra.mxu0 %v348
        %472 = vmatprep.subr.mxu0 0.0
        %473 = vmatpush1.xpose.msra.mxu0 %v349
        %474 = vmatprep.subr.mxu0 0.0
        %475 = vmatpush1.xpose.msra.mxu0 %v350
        %476 = vmatprep.subr.mxu0 0.0
        %477 = vmatpush1.xpose.msra.mxu0 %v351
        %478 = vmatprep.subr.mxu0 0.0
        %479 = vmatpush1.xpose.msra.mxu0 %v352
        %480 = vmatprep.subr.mxu0 0.0
        %481 = vmatpush1.xpose.msra.mxu0 %v353
        %482 = vmatprep.subr.mxu0 0.0
        %483 = vmatpush1.xpose.msra.mxu0 %v354
        %484 = vmatprep.subr.mxu0 0.0
        %485 = vmatpush1.xpose.msra.mxu0 %v355
        %486 = vmatprep.subr.mxu0 0.0
        %487 = vmatpush1.xpose.msra.mxu0 %v356
        %488 = vmatprep.subr.mxu0 0.0
        %489 = vmatpush1.xpose.msra.mxu0 %v357
        %490 = vmatprep.subr.mxu0 0.0
        %491 = vmatpush1.xpose.msra.mxu0 %v358
        %492 = vmatprep.subr.mxu0 0.0
        %493 = vmatpush1.xpose.msra.mxu0 %v359
        %494 = vmatprep.subr.mxu0 0.0
        %495 = vmatpush1.xpose.msra.mxu0 0.0
        %496 = vmatprep.subr.mxu0 0.0
        %497 = vmatpush1.xpose.msra.mxu0 0.0
        %498 = vmatprep.subr.mxu0 0.0
        %499 = vmatpush1.xpose.msra.mxu0 0.0
        %500 = vmatprep.subr.mxu0 0.0
        %501 = vmatpush1.xpose.msra.mxu0 0.0
        %502 = vmatprep.subr.mxu0 0.0
        %503 = vmatpush1.xpose.msra.mxu0 0.0
        %504 = vmatprep.subr.mxu0 0.0
        %505 = vmatpush1.xpose.msra.mxu0 0.0
        %506 = vmatprep.subr.mxu0 0.0
        %507 = vmatpush1.xpose.msra.mxu0 0.0
        %508 = vmatprep.subr.mxu0 0.0
        %509 = vmatpush1.xpose.msra.mxu0 0.0
        %510 = vmatprep.subr.mxu0 0.0
        %511 = vmatpush1.xpose.msra.mxu0 0.0
        %512 = vmatprep.subr.mxu0 0.0
        %513 = vmatpush1.xpose.msra.mxu0 0.0
        %514 = vmatprep.subr.mxu0 0.0
        %515 = vmatpush1.xpose.msra.mxu0 0.0
        %516 = vmatprep.subr.mxu0 0.0
        %517 = vmatpush1.xpose.msra.mxu0 0.0
        %518 = vmatprep.subr.mxu0 0.0
        %519 = vmatpush1.xpose.msra.mxu0 0.0
        %520 = vmatprep.subr.mxu0 0.0
        %521 = vmatpush1.xpose.msra.mxu0 0.0
        %522 = vmatprep.subr.mxu0 0.0
        %523 = vmatpush1.xpose.msra.mxu0 0.0
        %524 = vmatprep.subr.mxu0 0.0
        %525 = vmatpush1.xpose.msra.mxu0 0.0
        %526 = vmatprep.mubr.f32.mxu0 0.0
        %527 = vmatmul.mubr.f32.gmra.mrb[0].mxu0 %v459
        %v528 = vpop.f32.mrb[0].mxu0
        %v529 = vadd.f32 0.0, %v528
        %v530 = vpop.f32.mrb[0].mxu0
        %531 = vdwg.mxu0
        %v532 = vlaneseq
        %v533 = vand.u32 %v532, 127
        %vm534 = vcmp.lt.s32.totalorder %v533, 8
        %v535 = vsel %vm534, %v529, -1e+30
        %536 = vmax.xlane.f32.xlu0 %v535
        %v537 = vpop.xlane.xlu0 %536
        %v538 = vsub.f32 %v535, %v537
        %v539 = vmul.f32 %v538, 1.442695
        %v540 = vpow.pop %v539
        %541 = vadd.xlane.f32.xlu0 %v540
        %v542 = vpop.xlane.xlu0 %541
        %v543 = vrcp.pop %v542
        %v544 = vmul.f32 %v540, %v543
        %545 = vmatprep.subr.mxu0 0.0
        %546 = vmatpush1.msra.mxu0 %v360
        %547 = vmatprep.subr.mxu0 0.0
        %548 = vmatpush1.msra.mxu0 %v361
        %549 = vmatprep.subr.mxu0 0.0
        %550 = vmatpush1.msra.mxu0 %v362
        %551 = vmatprep.subr.mxu0 0.0
        %552 = vmatpush1.msra.mxu0 %v363
        %553 = vmatprep.subr.mxu0 0.0
        %554 = vmatpush1.msra.mxu0 %v364
        %555 = vmatprep.subr.mxu0 0.0
        %556 = vmatpush1.msra.mxu0 %v365
        %557 = vmatprep.subr.mxu0 0.0
        %558 = vmatpush1.msra.mxu0 %v366
        %559 = vmatprep.subr.mxu0 0.0
        %560 = vmatpush1.msra.mxu0 %v367
        %561 = vmatprep.subr.mxu0 0.0
        %562 = vmatpush1.msra.mxu0 %v368
        %563 = vmatprep.subr.mxu0 0.0
        %564 = vmatpush1.msra.mxu0 %v369
        %565 = vmatprep.subr.mxu0 0.0
        %566 = vmatpush1.msra.mxu0 %v370
        %567 = vmatprep.subr.mxu0 0.0
        %568 = vmatpush1.msra.mxu0 %v371
        %569 = vmatprep.subr.mxu0 0.0
        %570 = vmatpush1.msra.mxu0 %v372
        %571 = vmatprep.subr.mxu0 0.0
        %572 = vmatpush1.msra.mxu0 %v373
        %573 = vmatprep.subr.mxu0 0.0
        %574 = vmatpush1.msra.mxu0 %v374
        %575 = vmatprep.subr.mxu0 0.0
        %576 = vmatpush1.msra.mxu0 %v375
        %577 = vmatprep.subr.mxu0 0.0
        %578 = vmatpush1.msra.mxu0 0.0
        %579 = vmatprep.subr.mxu0 0.0
        %580 = vmatpush1.msra.mxu0 0.0
        %581 = vmatprep.subr.mxu0 0.0
        %582 = vmatpush1.msra.mxu0 0.0
        %583 = vmatprep.subr.mxu0 0.0
        %584 = vmatpush1.msra.mxu0 0.0
        %585 = vmatprep.subr.mxu0 0.0
        %586 = vmatpush1.msra.mxu0 0.0
        %587 = vmatprep.subr.mxu0 0.0
        %588 = vmatpush1.msra.mxu0 0.0
        %589 = vmatprep.subr.mxu0 0.0
        %590 = vmatpush1.msra.mxu0 0.0
        %591 = vmatprep.subr.mxu0 0.0
        %592 = vmatpush1.msra.mxu0 0.0
        %593 = vmatprep.subr.mxu0 0.0
        %594 = vmatpush1.msra.mxu0 0.0
        %595 = vmatprep.subr.mxu0 0.0
        %596 = vmatpush1.msra.mxu0 0.0
        %597 = vmatprep.subr.mxu0 0.0
        %598 = vmatpush1.msra.mxu0 0.0
        %599 = vmatprep.subr.mxu0 0.0
        %600 = vmatpush1.msra.mxu0 0.0
        %601 = vmatprep.subr.mxu0 0.0
        %602 = vmatpush1.msra.mxu0 0.0
        %603 = vmatprep.subr.mxu0 0.0
        %604 = vmatpush1.msra.mxu0 0.0
        %605 = vmatprep.subr.mxu0 0.0
        %606 = vmatpush1.msra.mxu0 0.0
        %607 = vmatprep.subr.mxu0 0.0
        %608 = vmatpush1.msra.mxu0 0.0
        %609 = vmatprep.mubr.f32.mxu0 0.0
        %610 = vmatmul.mubr.f32.gmra.mrb[0].mxu0 %v544
        %v611 = vpop.f32.mrb[0].mxu0
        %v612 = vadd.f32 0.0, %v611
        %v613 = vpop.f32.mrb[0].mxu0
        %614 = vdwg.mxu0
        %615 = vst [vmem:[%s335] sm:$0xff] %v612
        %616 = vst [vmem:[%s342] sm:$0xff] %v544
        %s617 = sand.u32 %s137, 1
        %s618 = scalar_lea.sflag [#allocation4], %s617
        %s619 = sand.u32 %s137, 1
        %s620 = smul.addr %s619, 8
        %s621 = scalar_lea.vmem [#allocation10], %s620
        %s622 = sand.u32 %s163, 1
        %s623 = scalar_lea.sflag [#allocation12], %s622
        %s624 = sand.u32 %s163, 1
        %s625 = smul.addr %s624, 8
        %s626 = scalar_lea.vmem [#allocation11], %s625
        // Predicated region
        $region53: #{tpu_custom_call.1} parent=35 // pred_check
          %p627 = pneg %p147
        $region54: #{tpu_custom_call.1} parent=35 // pred_check_branch
          %629 = sbr.rel (%p627) target = $region56
        $region55: #{tpu_custom_call.1} parent=35 // pred_region
          %s631 = ssub.s32 128, 128
          %632 = vsyncadd %s618, %s631
          %s633 = smul.addr %s30, 128
          %s634 = scalar_lea.hbm %s4, %s633
          %s636 = sshll.u32 %s621, 4
          %s637 = int_to_ptr.vmem [resolvable:$true] %s636
          %639 = dma.vmem_to_hbm [thread:$0]  %s637, 128, %s634, %s618
        $region56: #{tpu_custom_call.1} parent=35 // pred_fallthru
          _
        // Predicated region
        $region57: #{tpu_custom_call.1} parent=35 // pred_check
          %p640 = pneg %p173
        $region58: #{tpu_custom_call.1} parent=35 // pred_check_branch
          %642 = sbr.rel (%p640) target = $region60
        $region59: #{tpu_custom_call.1} parent=35 // pred_region
          %s644 = ssub.s32 128, 128
          %645 = vsyncadd %s623, %s644
          %s646 = smul.addr %s30, 128
          %s647 = scalar_lea.hbm %s5, %s646
          %s649 = sshll.u32 %s626, 4
          %s650 = int_to_ptr.vmem [resolvable:$true] %s649
          %652 = dma.vmem_to_hbm [thread:$0]  %s650, 128, %s647, %s623
        $region60: #{tpu_custom_call.1} parent=35 // pred_fallthru
          _
      $region36: #{tpu_custom_call.1} parent=5 // pred_fallthru
        _
      %p653 = scmp.le.s32.totalorder 2, %s25
      // Predicated region
      $region61: #{tpu_custom_call.1} parent=5 // pred_check
        %p654 = pneg %p653
      $region62: #{tpu_custom_call.1} parent=5 // pred_check_branch
        %656 = sbr.rel (%p654) target = $region64
      $region63: #{tpu_custom_call.1} parent=5 // pred_region
        %s657 = ssub.s32 %s25, 2
        // Predicated region
        $region65: #{tpu_custom_call.1} parent=63 // pred_check
          %p658 = pneg %p153
        $region66: #{tpu_custom_call.1} parent=63 // pred_check_branch
          %660 = sbr.rel (%p658) target = $region68
        $region67: #{tpu_custom_call.1} parent=63 // pred_region
          %s661 = sand.u32 %s138, 1
          %s662 = scalar_lea.sflag [#allocation4], %s661
          %s663 = sand.u32 %s138, 1
          %s664 = smul.addr %s663, 8
          %s665 = scalar_lea.vmem [#allocation10], %s664
          %666 = dma.done %s662, 128
        $region68: #{tpu_custom_call.1} parent=63 // pred_fallthru
          _
        // Predicated region
        $region69: #{tpu_custom_call.1} parent=63 // pred_check
          %p667 = pneg %p179
        $region70: #{tpu_custom_call.1} parent=63 // pred_check_branch
          %669 = sbr.rel (%p667) target = $region72
        $region71: #{tpu_custom_call.1} parent=63 // pred_region
          %s670 = sand.u32 %s164, 1
          %s671 = scalar_lea.sflag [#allocation12], %s670
          %s672 = sand.u32 %s164, 1
          %s673 = smul.addr %s672, 8
          %s674 = scalar_lea.vmem [#allocation11], %s673
          %675 = dma.done %s671, 128
        $region72: #{tpu_custom_call.1} parent=63 // pred_fallthru
          _
      $region64: #{tpu_custom_call.1} parent=5 // pred_fallthru
        _
    $region6: #{tpu_custom_call.1} parent=1 // loop_footer
      %s29 = sadd.s32 1, %s25
    $region7: #{tpu_custom_call.1} parent=1 // loop_footer_branch
      %24 = sbr.rel target = $region3
    $region8: #{tpu_custom_call.1} parent=1 // loop_exit
      _
    %676 = vsyncpa [#allocation3], 1
    %s677 = scalar_lea.sflag [#allocation3], 1
    %678 = vsyncpa %s677, 1
    %679 = vsyncpa [#allocation6], 1
    %s680 = scalar_lea.sflag [#allocation6], 1
    %681 = vsyncpa %s680, 1
    %682 = vsyncpa [#allocation9], 1
    %683 = vsyncpa [#allocation4], 1
    %s684 = scalar_lea.sflag [#allocation4], 1
    %685 = vsyncpa %s684, 1
    %686 = vsyncpa [#allocation12], 1
    %s687 = scalar_lea.sflag [#allocation12], 1
    %688 = vsyncpa %s687, 1

</llo_original>
